<compile_context>
chip_gen: v7x
topology: tpu7x:2x2x1
jax: 0.10.0
libtpu: 0.0.40
codegen_flags: <defaults>
</compile_context>

<pallas_src>
import functools

import jax
import jax.numpy as jnp
from jax import lax
from jax.experimental import pallas as pl
from jax.experimental.pallas import tpu as pltpu

EPS = 1e-5


def _pick_tile(m, target=1024):
    """Largest divisor of m that is <= target (falls back to a full block)."""
    t = min(m, target)
    while t > 1 and m % t != 0:
        t -= 1
    if t % 8 != 0 and t != m:   # keep the (8,128) block rule satisfied
        t = m
    return t


# ---------------------------------------------------------------------------
# K1: per-channel sum / sum-of-squares (single HBM pass over x, bn1 stats)
# ---------------------------------------------------------------------------
def _channel_stats_kernel(x_ref, sum_ref, sq_ref):
    @pl.when(pl.program_id(0) == 0)
    def _init():
        sum_ref[...] = jnp.zeros_like(sum_ref)
        sq_ref[...] = jnp.zeros_like(sq_ref)

    x = x_ref[...]
    sum_ref[...] += jnp.sum(x, axis=0, keepdims=True)
    sq_ref[...] += jnp.sum(x * x, axis=0, keepdims=True)


def _channel_stats(xf, tile_m=1024):
    M, C = xf.shape
    tm = _pick_tile(M, tile_m)
    stat_spec = pl.BlockSpec((1, C), lambda i: (0, 0))
    s, q = pl.pallas_call(
        _channel_stats_kernel,
        out_shape=(jax.ShapeDtypeStruct((1, C), jnp.float32),
                   jax.ShapeDtypeStruct((1, C), jnp.float32)),
        grid=(M // tm,),
        in_specs=[pl.BlockSpec((tm, C), lambda i: (i, 0))],
        out_specs=(stat_spec, stat_spec),
        compiler_params=pltpu.CompilerParams(
            dimension_semantics=("arbitrary",)),
    )(xf)
    return s[0], q[0]


# ---------------------------------------------------------------------------
# K2: conv1 (1x1) and 1x1 shortcut fused: relu(bn1(x)) @ [w1 | ws], + c1 stats
# ---------------------------------------------------------------------------
def _c1_shortcut_kernel(x_ref, s_ref, t_ref, w_ref,
                        c1_ref, sc_ref, sum_ref, sq_ref, *, planes):
    @pl.when(pl.program_id(0) == 0)
    def _init():
        sum_ref[...] = jnp.zeros_like(sum_ref)
        sq_ref[...] = jnp.zeros_like(sq_ref)

    a = jnp.maximum(x_ref[...] * s_ref[...] + t_ref[...], 0.0)
    y = jnp.dot(a, w_ref[...], preferred_element_type=jnp.float32)
    c1 = y[:, :planes]
    c1_ref[...] = c1
    sc_ref[...] = y[:, planes:]
    sum_ref[...] += jnp.sum(c1, axis=0, keepdims=True)
    sq_ref[...] += jnp.sum(c1 * c1, axis=0, keepdims=True)


def _c1_only_kernel(x_ref, s_ref, t_ref, w_ref, c1_ref, sum_ref, sq_ref):
    @pl.when(pl.program_id(0) == 0)
    def _init():
        sum_ref[...] = jnp.zeros_like(sum_ref)
        sq_ref[...] = jnp.zeros_like(sq_ref)

    a = jnp.maximum(x_ref[...] * s_ref[...] + t_ref[...], 0.0)
    c1 = jnp.dot(a, w_ref[...], preferred_element_type=jnp.float32)
    c1_ref[...] = c1
    sum_ref[...] += jnp.sum(c1, axis=0, keepdims=True)
    sq_ref[...] += jnp.sum(c1 * c1, axis=0, keepdims=True)


def _conv1_and_shortcut(xf, scale, shift, w1, ws, tile_m=1024):
    M, Cin = xf.shape
    planes = w1.shape[1]
    tm = _pick_tile(M, tile_m)
    grid = (M // tm,)
    x_spec = pl.BlockSpec((tm, Cin), lambda i: (i, 0))
    vec_spec = pl.BlockSpec((1, Cin), lambda i: (0, 0))
    stat_spec = pl.BlockSpec((1, planes), lambda i: (0, 0))
    cp = pltpu.CompilerParams(dimension_semantics=("arbitrary",))

    if ws is None:
        c1, s, q = pl.pallas_call(
            _c1_only_kernel,
            out_shape=(jax.ShapeDtypeStruct((M, planes), jnp.float32),
                       jax.ShapeDtypeStruct((1, planes), jnp.float32),
                       jax.ShapeDtypeStruct((1, planes), jnp.float32)),
            grid=grid,
            in_specs=[x_spec, vec_spec, vec_spec,
                      pl.BlockSpec((Cin, planes), lambda i: (0, 0))],
            out_specs=(pl.BlockSpec((tm, planes), lambda i: (i, 0)),
                       stat_spec, stat_spec),
            compiler_params=cp,
        )(xf, scale, shift, w1)
        return c1, None, s[0], q[0]

    exp = ws.shape[1]
    w_cat = jnp.concatenate([w1, ws], axis=1)          # (Cin, planes + exp)
    c1, sc, s, q = pl.pallas_call(
        functools.partial(_c1_shortcut_kernel, planes=planes),
        out_shape=(jax.ShapeDtypeStruct((M, planes), jnp.float32),
                   jax.ShapeDtypeStruct((M, exp), jnp.float32),
                   jax.ShapeDtypeStruct((1, planes), jnp.float32),
                   jax.ShapeDtypeStruct((1, planes), jnp.float32)),
        grid=grid,
        in_specs=[x_spec, vec_spec, vec_spec,
                  pl.BlockSpec((Cin, planes + exp), lambda i: (0, 0))],
        out_specs=(pl.BlockSpec((tm, planes), lambda i: (i, 0)),
                   pl.BlockSpec((tm, exp), lambda i: (i, 0)),
                   stat_spec, stat_spec),
        compiler_params=cp,
    )(xf, scale, shift, w_cat)
    return c1, sc, s[0], q[0]


# ---------------------------------------------------------------------------
# K3: bn2 + relu + 3x3 conv (stride 1, pad 1), + c2 stats
# ---------------------------------------------------------------------------
def _bn_relu_conv3x3_kernel(xp_ref, s_ref, t_ref, w_ref,
                            o_ref, sum_ref, sq_ref, *, H, W, Cin, Cout):
    @pl.when(pl.program_id(0) == 0)
    def _init():
        sum_ref[...] = jnp.zeros_like(sum_ref)
        sq_ref[...] = jnp.zeros_like(sq_ref)

    # xp_ref block: (1, H+2, W+2, Cin) -- zero-padded c1.  bn2+relu is applied
    # in-kernel; the halo is re-zeroed afterwards (padding must be applied
    # AFTER relu(bn2(.))) with an iota mask.
    xp = xp_ref[0]
    s = s_ref[...].reshape(1, 1, Cin)
    t = t_ref[...].reshape(1, 1, Cin)
    a = jnp.maximum(xp * s + t, 0.0)
    hh = lax.broadcasted_iota(jnp.int32, a.shape, 0)
    ww = lax.broadcasted_iota(jnp.int32, a.shape, 1)
    interior = (hh >= 1) & (hh <= H) & (ww >= 1) & (ww <= W)
    a = jnp.where(interior, a, 0.0)

    # 3x3 / stride-1 conv as 9 shifted matmuls accumulated in f32.
    # TODO(synk): for production channel counts, tile over H/Cout and use an
    # im2col (K = 9*Cin) matmul to avoid the per-tap relayouts and keep the
    # accumulator within the vreg file / v7x's smaller VMEM.
    acc = jnp.zeros((H * W, Cout), jnp.float32)
    for kh in range(3):
        for kw in range(3):
            win = a[kh:kh + H, kw:kw + W, :].reshape(H * W, Cin)
            acc = acc + jnp.dot(win, w_ref[kh, kw],
                                preferred_element_type=jnp.float32)
    o_ref[0] = acc.reshape(H, W, Cout)
    sum_ref[...] += jnp.sum(acc, axis=0, keepdims=True)
    sq_ref[...] += jnp.sum(acc * acc, axis=0, keepdims=True)


def _bn_relu_conv3x3(c1_pad, scale, shift, w):
    N, Hp, Wp, Cin = c1_pad.shape
    H, W = Hp - 2, Wp - 2
    Cout = w.shape[-1]
    stat_spec = pl.BlockSpec((1, Cout), lambda n: (0, 0))
    kernel = functools.partial(_bn_relu_conv3x3_kernel,
                               H=H, W=W, Cin=Cin, Cout=Cout)
    c2, s, q = pl.pallas_call(
        kernel,
        out_shape=(jax.ShapeDtypeStruct((N, H, W, Cout), jnp.float32),
                   jax.ShapeDtypeStruct((1, Cout), jnp.float32),
                   jax.ShapeDtypeStruct((1, Cout), jnp.float32)),
        grid=(N,),
        in_specs=[pl.BlockSpec((1, Hp, Wp, Cin), lambda n: (n, 0, 0, 0)),
                  pl.BlockSpec((1, Cin), lambda n: (0, 0)),
                  pl.BlockSpec((1, Cin), lambda n: (0, 0)),
                  pl.BlockSpec((3, 3, Cin, Cout), lambda n: (0, 0, 0, 0))],
        out_specs=(pl.BlockSpec((1, H, W, Cout), lambda n: (n, 0, 0, 0)),
                   stat_spec, stat_spec),
        compiler_params=pltpu.CompilerParams(
            dimension_semantics=("arbitrary",)),
    )(c1_pad, scale, shift, w)
    return c2, s[0], q[0]


# ---------------------------------------------------------------------------
# K4: conv3 (1x1) + residual add: relu(bn3(c2)) @ w3 + shortcut
# ---------------------------------------------------------------------------
def _bn_relu_mm_add_kernel(x_ref, s_ref, t_ref, w_ref, r_ref, o_ref):
    a = jnp.maximum(x_ref[...] * s_ref[...] + t_ref[...], 0.0)
    o_ref[...] = (jnp.dot(a, w_ref[...], preferred_element_type=jnp.float32)
                  + r_ref[...])


def _conv3_add(xf, scale, shift, w, residual, tile_m=1024):
    M, Cin = xf.shape
    Cout = w.shape[1]
    tm = _pick_tile(M, tile_m)
    return pl.pallas_call(
        _bn_relu_mm_add_kernel,
        out_shape=jax.ShapeDtypeStruct((M, Cout), jnp.float32),
        grid=(M // tm,),
        in_specs=[pl.BlockSpec((tm, Cin), lambda i: (i, 0)),
                  pl.BlockSpec((1, Cin), lambda i: (0, 0)),
                  pl.BlockSpec((1, Cin), lambda i: (0, 0)),
                  pl.BlockSpec((Cin, Cout), lambda i: (0, 0)),
                  pl.BlockSpec((tm, Cout), lambda i: (i, 0))],
        out_specs=pl.BlockSpec((tm, Cout), lambda i: (i, 0)),
        compiler_params=pltpu.CompilerParams(
            dimension_semantics=("parallel",)),
    )(xf, scale, shift, w, residual)


# ---------------------------------------------------------------------------
# BatchNorm affine terms from channel sums (biased variance, training mode)
# ---------------------------------------------------------------------------
def _affine_from_stats(ch_sum, ch_sq, count, gamma, beta):
    mean = ch_sum / count
    var = jnp.maximum(ch_sq / count - mean * mean, 0.0)
    scale = gamma / jnp.sqrt(var + EPS)
    shift = beta - mean * scale
    return scale[None, :], shift[None, :]


# ---------------------------------------------------------------------------
# PreActBottleneck forward
# ---------------------------------------------------------------------------
def init_params(key, in_planes, planes, expansion=4):
    ks = jax.random.split(key, 10)
    p = {}
    p["g1"] = 1.0 + 0.1 * jax.random.normal(ks[0], (in_planes,), jnp.float32)
    p["b1"] = 0.1 * jax.random.normal(ks[1], (in_planes,), jnp.float32)
    p["g2"] = 1.0 + 0.1 * jax.random.normal(ks[2], (planes,), jnp.float32)
    p["b2"] = 0.1 * jax.random.normal(ks[3], (planes,), jnp.float32)
    p["g3"] = 1.0 + 0.1 * jax.random.normal(ks[4], (planes,), jnp.float32)
    p["b3"] = 0.1 * jax.random.normal(ks[5], (planes,), jnp.float32)
    # conv weights stored channels-last: (Cin, Cout) / (kh, kw, Cin, Cout)
    p["w1"] = 0.2 * jax.random.normal(ks[6], (in_planes, planes), jnp.float32)
    p["w2"] = 0.2 * jax.random.normal(ks[7], (3, 3, planes, planes), jnp.float32)
    p["w3"] = 0.2 * jax.random.normal(ks[8], (planes, expansion * planes), jnp.float32)
    p["ws"] = 0.2 * jax.random.normal(ks[9], (in_planes, expansion * planes), jnp.float32)
    return p


def preact_bottleneck_forward(x_nchw, p, stride=1):
    # TODO(synk): stride > 1 (strided 3x3 + strided 1x1 shortcut) not implemented.
    assert stride == 1
    N, Cin, H, W = x_nchw.shape
    planes = p["w1"].shape[1]
    exp_planes = p["w3"].shape[1]
    has_shortcut = (stride != 1) or (Cin != exp_planes)
    M = N * H * W

    # NCHW -> flattened channels-last.  TODO(synk): within a full network keep
    # activations NHWC across blocks so these boundary relayouts disappear.
    x = jnp.transpose(x_nchw, (0, 2, 3, 1)).reshape(M, Cin)

    # bn1 statistics: single-pass Pallas reduction over x.
    x_sum, x_sq = _channel_stats(x)
    s1, t1 = _affine_from_stats(x_sum, x_sq, M, p["g1"], p["b1"])

    # conv1 (1x1) + shortcut (1x1) fused; c1 stats (for bn2) folded in.
    ws = p["ws"] if has_shortcut else None
    c1, shortcut, c1_sum, c1_sq = _conv1_and_shortcut(x, s1, t1, p["w1"], ws)
    if shortcut is None:
        shortcut = x                     # identity shortcut

    # conv2 (3x3, pad=1) with bn2+relu fused in-kernel; c2 stats folded in.
    s2, t2 = _affine_from_stats(c1_sum, c1_sq, M, p["g2"], p["b2"])
    # TODO(synk): the 1-pixel halo is still materialized by XLA's jnp.pad on
    # the (narrowest) c1 tensor; a fully-fused version would build the halo in
    # a VMEM scratch inside the kernel.
    c1_pad = jnp.pad(c1.reshape(N, H, W, planes),
                     ((0, 0), (1, 1), (1, 1), (0, 0)))
    c2_nhwc, c2_sum, c2_sq = _bn_relu_conv3x3(c1_pad, s2, t2, p["w2"])
    c2 = c2_nhwc.reshape(M, planes)

    # conv3 (1x1) + residual add.
    s3, t3 = _affine_from_stats(c2_sum, c2_sq, M, p["g3"], p["b3"])
    out = _conv3_add(c2, s3, t3, p["w3"], shortcut)

    return jnp.transpose(out.reshape(N, H, W, exp_planes), (0, 3, 1, 2))


# ---------------------------------------------------------------------------
# Pure-JAX reference (mirrors the PyTorch forward, NCHW)
# ---------------------------------------------------------------------------
def reference_forward(x, p):
    def bn(y, g, b):
        mean = jnp.mean(y, axis=(0, 2, 3), keepdims=True)
        var = jnp.mean(jnp.square(y - mean), axis=(0, 2, 3), keepdims=True)
        return ((y - mean) / jnp.sqrt(var + EPS) * g[None, :, None, None]
                + b[None, :, None, None])

    def conv(y, w_oihw, pad=0):
        return jax.lax.conv_general_dilated(
            y, w_oihw, (1, 1), [(pad, pad), (pad, pad)],
            dimension_numbers=("NCHW", "OIHW", "NCHW"))

    w1 = jnp.transpose(p["w1"])[:, :, None, None]
    w2 = jnp.transpose(p["w2"], (3, 2, 0, 1))
    w3 = jnp.transpose(p["w3"])[:, :, None, None]
    ws = jnp.transpose(p["ws"])[:, :, None, None]

    out = jax.nn.relu(bn(x, p["g1"], p["b1"]))
    shortcut = conv(out, ws)
    o = conv(out, w1)
    o = conv(jax.nn.relu(bn(o, p["g2"], p["b2"])), w2, pad=1)
    o = conv(jax.nn.relu(bn(o, p["g3"], p["b3"])), w3)
    return o + shortcut


if __name__ == "__main__":
    key = jax.random.PRNGKey(0)
    k_x, k_p = jax.random.split(key)

    N, in_planes, H, W = 2, 4, 16, 16
    planes = 4                              # expansion*planes = 16 -> shortcut conv exists

    x = jax.random.normal(k_x, (N, in_planes, H, W), jnp.float32)
    params = init_params(k_p, in_planes, planes)

    out = preact_bottleneck_forward(x, params, stride=1)
    out = jax.block_until_ready(out)

    assert out.shape == (N, 4 * planes, H, W)
    ref = reference_forward(x, params)
    assert jnp.allclose(out, ref, atol=1e-3, rtol=1e-3), float(
        jnp.max(jnp.abs(out - ref)))

    print("KERNEL_OK")
</pallas_src>

<mosaic_0001>
module attributes {stable_mosaic.version = 11 : i64} {
  func.func @_channel_stats_kernel(%arg0: i32, %arg1: memref<512x4xf32, #tpu.memory_space<vmem>>, %arg2: memref<1x4xf32, #tpu.memory_space<vmem>>, %arg3: memref<1x4xf32, #tpu.memory_space<vmem>>) attributes {dimension_semantics = [#tpu.dimension_semantics<arbitrary>], iteration_bounds = array<i64: 1>, scalar_prefetch = 0 : i64, scratch_operands = 0 : i64, tpu.core_type = #tpu.core_type<tc>, window_params = [{transform_indices = @transform_0, window_bounds = array<i64: 512, 4>}, {pipeline_mode = #tpu.pipeline_mode<synchronous>, transform_indices = @transform_1, window_bounds = array<i64: 1, 4>}, {pipeline_mode = #tpu.pipeline_mode<synchronous>, transform_indices = @transform_2, window_bounds = array<i64: 1, 4>}]} {
    %c0_i32 = arith.constant 0 : i32
    %0 = arith.cmpi eq, %arg0, %c0_i32 : i32
    %1 = arith.extui %0 : i1 to i32
    %c0_i32_0 = arith.constant 0 : i32
    %2 = arith.cmpi ne, %1, %c0_i32_0 : i32
    scf.if %2 {
      %cst_11 = arith.constant 0.000000e+00 : f32
      %15 = vector.broadcast %cst_11 : f32 to vector<1x4xf32>
      %c0_12 = arith.constant 0 : index
      %c0_13 = arith.constant 0 : index
      %16 = vector.load %arg2[%c0_12, %c0_13] : memref<1x4xf32, #tpu.memory_space<vmem>>, vector<1x4xf32>
      tpu.vector_store %arg2[%c0_12, %c0_13], %15 {strides = array<i32>} : memref<1x4xf32, #tpu.memory_space<vmem>>, vector<1x4xf32>,
      %cst_14 = arith.constant 0.000000e+00 : f32
      %17 = vector.broadcast %cst_14 : f32 to vector<1x4xf32>
      %c0_15 = arith.constant 0 : index
      %c0_16 = arith.constant 0 : index
      %18 = vector.load %arg3[%c0_15, %c0_16] : memref<1x4xf32, #tpu.memory_space<vmem>>, vector<1x4xf32>
      tpu.vector_store %arg3[%c0_15, %c0_16], %17 {strides = array<i32>} : memref<1x4xf32, #tpu.memory_space<vmem>>, vector<1x4xf32>,
    } else {
    }
    %c0 = arith.constant 0 : index
    %c0_1 = arith.constant 0 : index
    %3 = vector.load %arg1[%c0, %c0_1] : memref<512x4xf32, #tpu.memory_space<vmem>>, vector<512x4xf32>
    %c0_2 = arith.constant 0 : index
    %c0_3 = arith.constant 0 : index
    %4 = vector.load %arg2[%c0_2, %c0_3] : memref<1x4xf32, #tpu.memory_space<vmem>>, vector<1x4xf32>
    %cst = arith.constant dense<0.000000e+00> : vector<4xf32>
    %5 = vector.multi_reduction <add>, %3, %cst [0] : vector<512x4xf32> to vector<4xf32>
    %6 = vector.shape_cast %5 : vector<4xf32> to vector<1x4xf32>
    %7 = arith.addf %4, %6 : vector<1x4xf32>
    %c0_4 = arith.constant 0 : index
    %c0_5 = arith.constant 0 : index
    %8 = vector.load %arg2[%c0_4, %c0_5] : memref<1x4xf32, #tpu.memory_space<vmem>>, vector<1x4xf32>
    tpu.vector_store %arg2[%c0_4, %c0_5], %7 {strides = array<i32>} : memref<1x4xf32, #tpu.memory_space<vmem>>, vector<1x4xf32>,
    %c0_6 = arith.constant 0 : index
    %c0_7 = arith.constant 0 : index
    %9 = vector.load %arg3[%c0_6, %c0_7] : memref<1x4xf32, #tpu.memory_space<vmem>>, vector<1x4xf32>
    %10 = arith.mulf %3, %3 : vector<512x4xf32>
    %cst_8 = arith.constant dense<0.000000e+00> : vector<4xf32>
    %11 = vector.multi_reduction <add>, %10, %cst_8 [0] : vector<512x4xf32> to vector<4xf32>
    %12 = vector.shape_cast %11 : vector<4xf32> to vector<1x4xf32>
    %13 = arith.addf %9, %12 : vector<1x4xf32>
    %c0_9 = arith.constant 0 : index
    %c0_10 = arith.constant 0 : index
    %14 = vector.load %arg3[%c0_9, %c0_10] : memref<1x4xf32, #tpu.memory_space<vmem>>, vector<1x4xf32>
    tpu.vector_store %arg3[%c0_9, %c0_10], %13 {strides = array<i32>} : memref<1x4xf32, #tpu.memory_space<vmem>>, vector<1x4xf32>,
    return
  }
  func.func @transform_0(%arg0: i32) -> (i32, i32) {
    %c0_i32 = arith.constant 0 : i32
    %c0_i32_0 = arith.constant 0 : i32
    return %arg0, %c0_i32 : i32, i32
  }
  func.func @transform_1(%arg0: i32) -> (i32, i32) {
    %c0_i32 = arith.constant 0 : i32
    %c0_i32_0 = arith.constant 0 : i32
    %c0_i32_1 = arith.constant 0 : i32
    return %c0_i32, %c0_i32_0 : i32, i32
  }
  func.func @transform_2(%arg0: i32) -> (i32, i32) {
    %c0_i32 = arith.constant 0 : i32
    %c0_i32_0 = arith.constant 0 : i32
    %c0_i32_1 = arith.constant 0 : i32
    return %c0_i32, %c0_i32_0 : i32, i32
  }
}

</mosaic_0001>

<llo_original>
// kernel: tpu_custom_call.1
$region0: #{tpu_custom_call.1}
  #allocation0 [shape = 'u32[]', space=smem, size = 0x4, offset = 0x4, fixed_abs, tag = 'smem constant byte address 0x4 - core index']
  #allocation1 [shape = 'u32[144,128]{1,0:T(1,128)}', space=vmem, size = 0x12000, scoped, tag = 'internal scratch']
  %s0 = inlined_call_operand.vmem [shape: f32[512,4], index: 0, kind: input, shape index: {}]
  %s1 = inlined_call_operand.hbm [shape: f32[1,4], index: 1, kind: output, shape index: {0}]
  %s2 = inlined_call_operand.hbm [shape: f32[1,4], index: 2, kind: output, shape index: {1}]
  %3 = xla_tuple %s1, %s2
  %s4 = sld [smem:[#allocation0]]
  $region26: #{tpu_custom_call.1} parent=0
    _
  %s6 = ssub.s32 1, %s4
  %s7 = scalar_select 0, %s6, %s4
  $region1: #{tpu_custom_call.1} parent=0
    #allocation2 [shape = 'u8[512]{0}', space=vmem, size = 0x400, scoped, tag = 'output window, operand 0, single buffered']
    #allocation3 [shape = 's32[1]{0}', space=sflag, size = 0x4, scoped, tag = 'scoped memory for tpu_custom_call.1']
    #allocation4 [shape = 'u8[512]{0}', space=vmem, size = 0x400, scoped, tag = 'output window, operand 1, single buffered']
    #allocation5 [shape = 's32[1]{0}', space=sflag, size = 0x4, scoped, tag = 'scoped memory for tpu_custom_call.1']
    %8 = vsyncpa [#allocation3], 0
    %9 = vsyncpa [#allocation5], 0
    // Predicated region
    $region2: #{tpu_custom_call.1} parent=1 // pred_check
      _
    $region3: #{tpu_custom_call.1} parent=1 // pred_check_branch
      %11 = sbr.rel (0) target = $region5
    $region4: #{tpu_custom_call.1} parent=1 // pred_region
      _
    $region5: #{tpu_custom_call.1} parent=1 // pred_fallthru
      _
    %p12 = scmp.eq.s32.totalorder 0, 0
    // Predicated region
    $region6: #{tpu_custom_call.1} parent=1 // pred_check
      %p13 = pneg %p12
    $region7: #{tpu_custom_call.1} parent=1 // pred_check_branch
      %15 = sbr.rel (%p13) target = $region9
    $region8: #{tpu_custom_call.1} parent=1 // pred_region
      %vm16 = vcmask 24576
      %17 = vst.msk [vmem:[#allocation2] sm:$0x1] %vm16, 0.0
      %18 = vst.msk [vmem:[#allocation4] sm:$0x1] %vm16, 0.0
    $region9: #{tpu_custom_call.1} parent=1 // pred_fallthru
      _
    %v19 = vld [vmem:[%s0] sm:$0xff]
    %v20 = vld [vmem:[%s0 + $0x8] sm:$0xff]
    %v21 = vld [vmem:[%s0 + $0x10] sm:$0xff]
    %v22 = vld [vmem:[%s0 + $0x18] sm:$0xff]
    %v23 = vld [vmem:[%s0 + $0x20] sm:$0xff]
    %v24 = vld [vmem:[%s0 + $0x28] sm:$0xff]
    %v25 = vld [vmem:[%s0 + $0x30] sm:$0xff]
    %v26 = vld [vmem:[%s0 + $0x38] sm:$0xff]
    %v27 = vld [vmem:[%s0 + $0x40] sm:$0xff]
    %v28 = vld [vmem:[%s0 + $0x48] sm:$0xff]
    %v29 = vld [vmem:[%s0 + $0x50] sm:$0xff]
    %v30 = vld [vmem:[%s0 + $0x58] sm:$0xff]
    %v31 = vld [vmem:[%s0 + $0x60] sm:$0xff]
    %v32 = vld [vmem:[%s0 + $0x68] sm:$0xff]
    %v33 = vld [vmem:[%s0 + $0x70] sm:$0xff]
    %v34 = vld [vmem:[%s0 + $0x78] sm:$0xff]
    %v35 = vld [vmem:[%s0 + $0x80] sm:$0xff]
    %v36 = vld [vmem:[%s0 + $0x88] sm:$0xff]
    %v37 = vld [vmem:[%s0 + $0x90] sm:$0xff]
    %v38 = vld [vmem:[%s0 + $0x98] sm:$0xff]
    %v39 = vld [vmem:[%s0 + $0xa0] sm:$0xff]
    %v40 = vld [vmem:[%s0 + $0xa8] sm:$0xff]
    %v41 = vld [vmem:[%s0 + $0xb0] sm:$0xff]
    %v42 = vld [vmem:[%s0 + $0xb8] sm:$0xff]
    %v43 = vld [vmem:[%s0 + $0xc0] sm:$0xff]
    %v44 = vld [vmem:[%s0 + $0xc8] sm:$0xff]
    %v45 = vld [vmem:[%s0 + $0xd0] sm:$0xff]
    %v46 = vld [vmem:[%s0 + $0xd8] sm:$0xff]
    %v47 = vld [vmem:[%s0 + $0xe0] sm:$0xff]
    %v48 = vld [vmem:[%s0 + $0xe8] sm:$0xff]
    %v49 = vld [vmem:[%s0 + $0xf0] sm:$0xff]
    %v50 = vld [vmem:[%s0 + $0xf8] sm:$0xff]
    %v51 = vld [vmem:[%s0 + $0x100] sm:$0xff]
    %v52 = vld [vmem:[%s0 + $0x108] sm:$0xff]
    %v53 = vld [vmem:[%s0 + $0x110] sm:$0xff]
    %v54 = vld [vmem:[%s0 + $0x118] sm:$0xff]
    %v55 = vld [vmem:[%s0 + $0x120] sm:$0xff]
    %v56 = vld [vmem:[%s0 + $0x128] sm:$0xff]
    %v57 = vld [vmem:[%s0 + $0x130] sm:$0xff]
    %v58 = vld [vmem:[%s0 + $0x138] sm:$0xff]
    %v59 = vld [vmem:[%s0 + $0x140] sm:$0xff]
    %v60 = vld [vmem:[%s0 + $0x148] sm:$0xff]
    %v61 = vld [vmem:[%s0 + $0x150] sm:$0xff]
    %v62 = vld [vmem:[%s0 + $0x158] sm:$0xff]
    %v63 = vld [vmem:[%s0 + $0x160] sm:$0xff]
    %v64 = vld [vmem:[%s0 + $0x168] sm:$0xff]
    %v65 = vld [vmem:[%s0 + $0x170] sm:$0xff]
    %v66 = vld [vmem:[%s0 + $0x178] sm:$0xff]
    %v67 = vld [vmem:[%s0 + $0x180] sm:$0xff]
    %v68 = vld [vmem:[%s0 + $0x188] sm:$0xff]
    %v69 = vld [vmem:[%s0 + $0x190] sm:$0xff]
    %v70 = vld [vmem:[%s0 + $0x198] sm:$0xff]
    %v71 = vld [vmem:[%s0 + $0x1a0] sm:$0xff]
    %v72 = vld [vmem:[%s0 + $0x1a8] sm:$0xff]
    %v73 = vld [vmem:[%s0 + $0x1b0] sm:$0xff]
    %v74 = vld [vmem:[%s0 + $0x1b8] sm:$0xff]
    %v75 = vld [vmem:[%s0 + $0x1c0] sm:$0xff]
    %v76 = vld [vmem:[%s0 + $0x1c8] sm:$0xff]
    %v77 = vld [vmem:[%s0 + $0x1d0] sm:$0xff]
    %v78 = vld [vmem:[%s0 + $0x1d8] sm:$0xff]
    %v79 = vld [vmem:[%s0 + $0x1e0] sm:$0xff]
    %v80 = vld [vmem:[%s0 + $0x1e8] sm:$0xff]
    %v81 = vld [vmem:[%s0 + $0x1f0] sm:$0xff]
    %v82 = vld [vmem:[%s0 + $0x1f8] sm:$0xff]
    %v83 = vld [vmem:[#allocation2] sm:$0x1]
    %vm84 = vcmask 31744
    %v85 = vsel %vm84, %v19, 0.0
    %v86 = vsel %vm84, %v20, 0.0
    %v87 = vadd.f32 %v85, %v86
    %v88 = vsel %vm84, %v21, 0.0
    %v89 = vadd.f32 %v87, %v88
    %v90 = vsel %vm84, %v22, 0.0
    %v91 = vadd.f32 %v89, %v90
    %v92 = vsel %vm84, %v23, 0.0
    %v93 = vadd.f32 %v91, %v92
    %v94 = vsel %vm84, %v24, 0.0
    %v95 = vadd.f32 %v93, %v94
    %v96 = vsel %vm84, %v25, 0.0
    %v97 = vadd.f32 %v95, %v96
    %v98 = vsel %vm84, %v26, 0.0
    %v99 = vadd.f32 %v97, %v98
    %v100 = vsel %vm84, %v27, 0.0
    %v101 = vadd.f32 %v99, %v100
    %v102 = vsel %vm84, %v28, 0.0
    %v103 = vadd.f32 %v101, %v102
    %v104 = vsel %vm84, %v29, 0.0
    %v105 = vadd.f32 %v103, %v104
    %v106 = vsel %vm84, %v30, 0.0
    %v107 = vadd.f32 %v105, %v106
    %v108 = vsel %vm84, %v31, 0.0
    %v109 = vadd.f32 %v107, %v108
    %v110 = vsel %vm84, %v32, 0.0
    %v111 = vadd.f32 %v109, %v110
    %v112 = vsel %vm84, %v33, 0.0
    %v113 = vadd.f32 %v111, %v112
    %v114 = vsel %vm84, %v34, 0.0
    %v115 = vadd.f32 %v113, %v114
    %v116 = vsel %vm84, %v35, 0.0
    %v117 = vadd.f32 %v115, %v116
    %v118 = vsel %vm84, %v36, 0.0
    %v119 = vadd.f32 %v117, %v118
    %v120 = vsel %vm84, %v37, 0.0
    %v121 = vadd.f32 %v119, %v120
    %v122 = vsel %vm84, %v38, 0.0
    %v123 = vadd.f32 %v121, %v122
    %v124 = vsel %vm84, %v39, 0.0
    %v125 = vadd.f32 %v123, %v124
    %v126 = vsel %vm84, %v40, 0.0
    %v127 = vadd.f32 %v125, %v126
    %v128 = vsel %vm84, %v41, 0.0
    %v129 = vadd.f32 %v127, %v128
    %v130 = vsel %vm84, %v42, 0.0
    %v131 = vadd.f32 %v129, %v130
    %v132 = vsel %vm84, %v43, 0.0
    %v133 = vadd.f32 %v131, %v132
    %v134 = vsel %vm84, %v44, 0.0
    %v135 = vadd.f32 %v133, %v134
    %v136 = vsel %vm84, %v45, 0.0
    %v137 = vadd.f32 %v135, %v136
    %v138 = vsel %vm84, %v46, 0.0
    %v139 = vadd.f32 %v137, %v138
    %v140 = vsel %vm84, %v47, 0.0
    %v141 = vadd.f32 %v139, %v140
    %v142 = vsel %vm84, %v48, 0.0
    %v143 = vadd.f32 %v141, %v142
    %v144 = vsel %vm84, %v49, 0.0
    %v145 = vadd.f32 %v143, %v144
    %v146 = vsel %vm84, %v50, 0.0
    %v147 = vadd.f32 %v145, %v146
    %v148 = vsel %vm84, %v51, 0.0
    %v149 = vadd.f32 %v147, %v148
    %v150 = vsel %vm84, %v52, 0.0
    %v151 = vadd.f32 %v149, %v150
    %v152 = vsel %vm84, %v53, 0.0
    %v153 = vadd.f32 %v151, %v152
    %v154 = vsel %vm84, %v54, 0.0
    %v155 = vadd.f32 %v153, %v154
    %v156 = vsel %vm84, %v55, 0.0
    %v157 = vadd.f32 %v155, %v156
    %v158 = vsel %vm84, %v56, 0.0
    %v159 = vadd.f32 %v157, %v158
    %v160 = vsel %vm84, %v57, 0.0
    %v161 = vadd.f32 %v159, %v160
    %v162 = vsel %vm84, %v58, 0.0
    %v163 = vadd.f32 %v161, %v162
    %v164 = vsel %vm84, %v59, 0.0
    %v165 = vadd.f32 %v163, %v164
    %v166 = vsel %vm84, %v60, 0.0
    %v167 = vadd.f32 %v165, %v166
    %v168 = vsel %vm84, %v61, 0.0
    %v169 = vadd.f32 %v167, %v168
    %v170 = vsel %vm84, %v62, 0.0
    %v171 = vadd.f32 %v169, %v170
    %v172 = vsel %vm84, %v63, 0.0
    %v173 = vadd.f32 %v171, %v172
    %v174 = vsel %vm84, %v64, 0.0
    %v175 = vadd.f32 %v173, %v174
    %v176 = vsel %vm84, %v65, 0.0
    %v177 = vadd.f32 %v175, %v176
    %v178 = vsel %vm84, %v66, 0.0
    %v179 = vadd.f32 %v177, %v178
    %v180 = vsel %vm84, %v67, 0.0
    %v181 = vadd.f32 %v179, %v180
    %v182 = vsel %vm84, %v68, 0.0
    %v183 = vadd.f32 %v181, %v182
    %v184 = vsel %vm84, %v69, 0.0
    %v185 = vadd.f32 %v183, %v184
    %v186 = vsel %vm84, %v70, 0.0
    %v187 = vadd.f32 %v185, %v186
    %v188 = vsel %vm84, %v71, 0.0
    %v189 = vadd.f32 %v187, %v188
    %v190 = vsel %vm84, %v72, 0.0
    %v191 = vadd.f32 %v189, %v190
    %v192 = vsel %vm84, %v73, 0.0
    %v193 = vadd.f32 %v191, %v192
    %v194 = vsel %vm84, %v74, 0.0
    %v195 = vadd.f32 %v193, %v194
    %v196 = vsel %vm84, %v75, 0.0
    %v197 = vadd.f32 %v195, %v196
    %v198 = vsel %vm84, %v76, 0.0
    %v199 = vadd.f32 %v197, %v198
    %v200 = vsel %vm84, %v77, 0.0
    %v201 = vadd.f32 %v199, %v200
    %v202 = vsel %vm84, %v78, 0.0
    %v203 = vadd.f32 %v201, %v202
    %v204 = vsel %vm84, %v79, 0.0
    %v205 = vadd.f32 %v203, %v204
    %v206 = vsel %vm84, %v80, 0.0
    %v207 = vadd.f32 %v205, %v206
    %v208 = vsel %vm84, %v81, 0.0
    %v209 = vadd.f32 %v207, %v208
    %v210 = vsel %vm84, %v82, 0.0
    %v211 = vadd.f32 %v209, %v210
    %v212 = vrot.slane %v211, 4
    %v213 = vadd.f32 %v211, %v212
    %v214 = vrot.slane %v213, 2
    %v215 = vadd.f32 %v213, %v214
    %v216 = vrot.slane %v215, 1
    %v217 = vadd.f32 %v215, %v216
    %v218 = vadd.f32 %v83, %v217
    %vm219 = vcmask 24576
    %220 = vst.msk [vmem:[#allocation2] sm:$0x1] %vm219, %v218
    %v221 = vld [vmem:[#allocation4] sm:$0x1]
    %v222 = vmul.f32 %v19, %v19
    %v223 = vmul.f32 %v20, %v20
    %v224 = vmul.f32 %v21, %v21
    %v225 = vmul.f32 %v22, %v22
    %v226 = vmul.f32 %v23, %v23
    %v227 = vmul.f32 %v24, %v24
    %v228 = vmul.f32 %v25, %v25
    %v229 = vmul.f32 %v26, %v26
    %v230 = vmul.f32 %v27, %v27
    %v231 = vmul.f32 %v28, %v28
    %v232 = vmul.f32 %v29, %v29
    %v233 = vmul.f32 %v30, %v30
    %v234 = vmul.f32 %v31, %v31
    %v235 = vmul.f32 %v32, %v32
    %v236 = vmul.f32 %v33, %v33
    %v237 = vmul.f32 %v34, %v34
    %v238 = vmul.f32 %v35, %v35
    %v239 = vmul.f32 %v36, %v36
    %v240 = vmul.f32 %v37, %v37
    %v241 = vmul.f32 %v38, %v38
    %v242 = vmul.f32 %v39, %v39
    %v243 = vmul.f32 %v40, %v40
    %v244 = vmul.f32 %v41, %v41
    %v245 = vmul.f32 %v42, %v42
    %v246 = vmul.f32 %v43, %v43
    %v247 = vmul.f32 %v44, %v44
    %v248 = vmul.f32 %v45, %v45
    %v249 = vmul.f32 %v46, %v46
    %v250 = vmul.f32 %v47, %v47
    %v251 = vmul.f32 %v48, %v48
    %v252 = vmul.f32 %v49, %v49
    %v253 = vmul.f32 %v50, %v50
    %v254 = vmul.f32 %v51, %v51
    %v255 = vmul.f32 %v52, %v52
    %v256 = vmul.f32 %v53, %v53
    %v257 = vmul.f32 %v54, %v54
    %v258 = vmul.f32 %v55, %v55
    %v259 = vmul.f32 %v56, %v56
    %v260 = vmul.f32 %v57, %v57
    %v261 = vmul.f32 %v58, %v58
    %v262 = vmul.f32 %v59, %v59
    %v263 = vmul.f32 %v60, %v60
    %v264 = vmul.f32 %v61, %v61
    %v265 = vmul.f32 %v62, %v62
    %v266 = vmul.f32 %v63, %v63
    %v267 = vmul.f32 %v64, %v64
    %v268 = vmul.f32 %v65, %v65
    %v269 = vmul.f32 %v66, %v66
    %v270 = vmul.f32 %v67, %v67
    %v271 = vmul.f32 %v68, %v68
    %v272 = vmul.f32 %v69, %v69
    %v273 = vmul.f32 %v70, %v70
    %v274 = vmul.f32 %v71, %v71
    %v275 = vmul.f32 %v72, %v72
    %v276 = vmul.f32 %v73, %v73
    %v277 = vmul.f32 %v74, %v74
    %v278 = vmul.f32 %v75, %v75
    %v279 = vmul.f32 %v76, %v76
    %v280 = vmul.f32 %v77, %v77
    %v281 = vmul.f32 %v78, %v78
    %v282 = vmul.f32 %v79, %v79
    %v283 = vmul.f32 %v80, %v80
    %v284 = vmul.f32 %v81, %v81
    %v285 = vmul.f32 %v82, %v82
    %v286 = vsel %vm84, %v222, 0.0
    %v287 = vsel %vm84, %v223, 0.0
    %v288 = vadd.f32 %v286, %v287
    %v289 = vsel %vm84, %v224, 0.0
    %v290 = vadd.f32 %v288, %v289
    %v291 = vsel %vm84, %v225, 0.0
    %v292 = vadd.f32 %v290, %v291
    %v293 = vsel %vm84, %v226, 0.0
    %v294 = vadd.f32 %v292, %v293
    %v295 = vsel %vm84, %v227, 0.0
    %v296 = vadd.f32 %v294, %v295
    %v297 = vsel %vm84, %v228, 0.0
    %v298 = vadd.f32 %v296, %v297
    %v299 = vsel %vm84, %v229, 0.0
    %v300 = vadd.f32 %v298, %v299
    %v301 = vsel %vm84, %v230, 0.0
    %v302 = vadd.f32 %v300, %v301
    %v303 = vsel %vm84, %v231, 0.0
    %v304 = vadd.f32 %v302, %v303
    %v305 = vsel %vm84, %v232, 0.0
    %v306 = vadd.f32 %v304, %v305
    %v307 = vsel %vm84, %v233, 0.0
    %v308 = vadd.f32 %v306, %v307
    %v309 = vsel %vm84, %v234, 0.0
    %v310 = vadd.f32 %v308, %v309
    %v311 = vsel %vm84, %v235, 0.0
    %v312 = vadd.f32 %v310, %v311
    %v313 = vsel %vm84, %v236, 0.0
    %v314 = vadd.f32 %v312, %v313
    %v315 = vsel %vm84, %v237, 0.0
    %v316 = vadd.f32 %v314, %v315
    %v317 = vsel %vm84, %v238, 0.0
    %v318 = vadd.f32 %v316, %v317
    %v319 = vsel %vm84, %v239, 0.0
    %v320 = vadd.f32 %v318, %v319
    %v321 = vsel %vm84, %v240, 0.0
    %v322 = vadd.f32 %v320, %v321
    %v323 = vsel %vm84, %v241, 0.0
    %v324 = vadd.f32 %v322, %v323
    %v325 = vsel %vm84, %v242, 0.0
    %v326 = vadd.f32 %v324, %v325
    %v327 = vsel %vm84, %v243, 0.0
    %v328 = vadd.f32 %v326, %v327
    %v329 = vsel %vm84, %v244, 0.0
    %v330 = vadd.f32 %v328, %v329
    %v331 = vsel %vm84, %v245, 0.0
    %v332 = vadd.f32 %v330, %v331
    %v333 = vsel %vm84, %v246, 0.0
    %v334 = vadd.f32 %v332, %v333
    %v335 = vsel %vm84, %v247, 0.0
    %v336 = vadd.f32 %v334, %v335
    %v337 = vsel %vm84, %v248, 0.0
    %v338 = vadd.f32 %v336, %v337
    %v339 = vsel %vm84, %v249, 0.0
    %v340 = vadd.f32 %v338, %v339
    %v341 = vsel %vm84, %v250, 0.0
    %v342 = vadd.f32 %v340, %v341
    %v343 = vsel %vm84, %v251, 0.0
    %v344 = vadd.f32 %v342, %v343
    %v345 = vsel %vm84, %v252, 0.0
    %v346 = vadd.f32 %v344, %v345
    %v347 = vsel %vm84, %v253, 0.0
    %v348 = vadd.f32 %v346, %v347
    %v349 = vsel %vm84, %v254, 0.0
    %v350 = vadd.f32 %v348, %v349
    %v351 = vsel %vm84, %v255, 0.0
    %v352 = vadd.f32 %v350, %v351
    %v353 = vsel %vm84, %v256, 0.0
    %v354 = vadd.f32 %v352, %v353
    %v355 = vsel %vm84, %v257, 0.0
    %v356 = vadd.f32 %v354, %v355
    %v357 = vsel %vm84, %v258, 0.0
    %v358 = vadd.f32 %v356, %v357
    %v359 = vsel %vm84, %v259, 0.0
    %v360 = vadd.f32 %v358, %v359
    %v361 = vsel %vm84, %v260, 0.0
    %v362 = vadd.f32 %v360, %v361
    %v363 = vsel %vm84, %v261, 0.0
    %v364 = vadd.f32 %v362, %v363
    %v365 = vsel %vm84, %v262, 0.0
    %v366 = vadd.f32 %v364, %v365
    %v367 = vsel %vm84, %v263, 0.0
    %v368 = vadd.f32 %v366, %v367
    %v369 = vsel %vm84, %v264, 0.0
    %v370 = vadd.f32 %v368, %v369
    %v371 = vsel %vm84, %v265, 0.0
    %v372 = vadd.f32 %v370, %v371
    %v373 = vsel %vm84, %v266, 0.0
    %v374 = vadd.f32 %v372, %v373
    %v375 = vsel %vm84, %v267, 0.0
    %v376 = vadd.f32 %v374, %v375
    %v377 = vsel %vm84, %v268, 0.0
    %v378 = vadd.f32 %v376, %v377
    %v379 = vsel %vm84, %v269, 0.0
    %v380 = vadd.f32 %v378, %v379
    %v381 = vsel %vm84, %v270, 0.0
    %v382 = vadd.f32 %v380, %v381
    %v383 = vsel %vm84, %v271, 0.0
    %v384 = vadd.f32 %v382, %v383
    %v385 = vsel %vm84, %v272, 0.0
    %v386 = vadd.f32 %v384, %v385
    %v387 = vsel %vm84, %v273, 0.0
    %v388 = vadd.f32 %v386, %v387
    %v389 = vsel %vm84, %v274, 0.0
    %v390 = vadd.f32 %v388, %v389
    %v391 = vsel %vm84, %v275, 0.0
    %v392 = vadd.f32 %v390, %v391
    %v393 = vsel %vm84, %v276, 0.0
    %v394 = vadd.f32 %v392, %v393
    %v395 = vsel %vm84, %v277, 0.0
    %v396 = vadd.f32 %v394, %v395
    %v397 = vsel %vm84, %v278, 0.0
    %v398 = vadd.f32 %v396, %v397
    %v399 = vsel %vm84, %v279, 0.0
    %v400 = vadd.f32 %v398, %v399
    %v401 = vsel %vm84, %v280, 0.0
    %v402 = vadd.f32 %v400, %v401
    %v403 = vsel %vm84, %v281, 0.0
    %v404 = vadd.f32 %v402, %v403
    %v405 = vsel %vm84, %v282, 0.0
    %v406 = vadd.f32 %v404, %v405
    %v407 = vsel %vm84, %v283, 0.0
    %v408 = vadd.f32 %v406, %v407
    %v409 = vsel %vm84, %v284, 0.0
    %v410 = vadd.f32 %v408, %v409
    %v411 = vsel %vm84, %v285, 0.0
    %v412 = vadd.f32 %v410, %v411
    %v413 = vrot.slane %v412, 4
    %v414 = vadd.f32 %v412, %v413
    %v415 = vrot.slane %v414, 2
    %v416 = vadd.f32 %v414, %v415
    %v417 = vrot.slane %v416, 1
    %v418 = vadd.f32 %v416, %v417
    %v419 = vadd.f32 %v221, %v418
    %420 = vst.msk [vmem:[#allocation4] sm:$0x1] %vm219, %v419
    // Predicated region
    $region10: #{tpu_custom_call.1} parent=1 // pred_check
      _
    $region11: #{tpu_custom_call.1} parent=1 // pred_check_branch
      %422 = sbr.rel (0) target = $region13
    $region12: #{tpu_custom_call.1} parent=1 // pred_region
      %s424 = ssub.s32 16, 16
      %425 = vsyncadd [#allocation3], %s424
      %s427 = sshll.u32 [#allocation2], 4
      %s428 = int_to_ptr.vmem [resolvable:$true] %s427
      %430 = dma.vmem_to_hbm [thread:$0]  %s428, 16, %s1, [#allocation3]
    $region13: #{tpu_custom_call.1} parent=1 // pred_fallthru
      _
    // Predicated region
    $region14: #{tpu_custom_call.1} parent=1 // pred_check
      _
    $region15: #{tpu_custom_call.1} parent=1 // pred_check_branch
      %432 = sbr.rel (0) target = $region17
    $region16: #{tpu_custom_call.1} parent=1 // pred_region
      %s434 = ssub.s32 16, 16
      %435 = vsyncadd [#allocation5], %s434
      %s437 = sshll.u32 [#allocation4], 4
      %s438 = int_to_ptr.vmem [resolvable:$true] %s437
      %440 = dma.vmem_to_hbm [thread:$0]  %s438, 16, %s2, [#allocation5]
    $region17: #{tpu_custom_call.1} parent=1 // pred_fallthru
      _
    // Predicated region
    $region18: #{tpu_custom_call.1} parent=1 // pred_check
      _
    $region19: #{tpu_custom_call.1} parent=1 // pred_check_branch
      %442 = sbr.rel (0) target = $region21
    $region20: #{tpu_custom_call.1} parent=1 // pred_region
      %443 = dma.done [#allocation3], 16
    $region21: #{tpu_custom_call.1} parent=1 // pred_fallthru
      _
    // Predicated region
    $region22: #{tpu_custom_call.1} parent=1 // pred_check
      _
    $region23: #{tpu_custom_call.1} parent=1 // pred_check_branch
      %445 = sbr.rel (0) target = $region25
    $region24: #{tpu_custom_call.1} parent=1 // pred_region
      %446 = dma.done [#allocation5], 16
    $region25: #{tpu_custom_call.1} parent=1 // pred_fallthru
      _
    %447 = vsyncpa [#allocation3], 1
    %448 = vsyncpa [#allocation5], 1

</llo_original>
